<compile_context>
chip_gen: v6e
topology: v6e:2x2x1
jax: 0.10.0
libtpu: 0.0.40
codegen_flags: <defaults>
</compile_context>

<pallas_src>
import jax
import jax.numpy as jnp
from jax.experimental import pallas as pl
from jax.experimental.pallas import tpu as pltpu


def fused_predictor_kernel(x_ref, wf_ref, bf_ref, relu_sel_ref, w2_ref, b2_ref, out_ref):
    # x_ref:        (TB, F)       batch tile of inputs
    # wf_ref:       (F, C_pad)    [W1 | masked Wp | 0-padding]   (resident)
    # bf_ref:       (1, C_pad)    [b1 | bp | 0]                  (resident)
    # relu_sel_ref: (1, C_pad)    1.0 -> ReLU lane, 0.0 -> sigmoid lane (resident)
    # w2_ref:       (1, C_pad)    fused final weight row, 0 on padded lanes (resident)
    # b2_ref:       (1, 1)        final bias                     (resident)
    # out_ref:      (TB, 1)
    x = x_ref[...]

    # One fused MXU matmul for both the hidden layer and the pivot head.
    z = jnp.dot(x, wf_ref[...], preferred_element_type=jnp.float32) + bf_ref[...]

    # Per-lane activation: ReLU on the H "hidden" lanes (and padding), sigmoid on the P pivot lanes.
    act = jnp.where(relu_sel_ref[...] > 0.5, jnp.maximum(z, 0.0), jax.nn.sigmoid(z))

    # Final layer as VPU multiply + lane reduction (avoids an N=1 MXU matmul).
    logit = jnp.sum(act * w2_ref[...], axis=-1, keepdims=True) + b2_ref[...]   # (TB, 1)
    out_ref[...] = jax.nn.sigmoid(logit)


def predictor_with_pivots(x, pivots, w1, b1, wp, bp, w2, b2, *, batch_tile=128):
    """Forward pass of PredictorWithPivots.

    x:  (F,) single example (as in the torch module) or (B, F) batch.
    w1: (F, H), b1: (H,)         -- model (Linear + ReLU), stored (in, out)
    wp: (F, P), bp: (P,)         -- pivot_model (Linear + Sigmoid head)
    w2: (H+P, 1), b2: (1,)       -- classifier (Linear + Sigmoid)
    Returns (1,) for a single example, (B, 1) for a batch.
    """
    single = (x.ndim == 1)
    x2 = x[None, :] if single else x
    x2 = x2.astype(jnp.float32)
    B, F = x2.shape
    H = w1.shape[1]
    P = wp.shape[1]
    C = H + P
    assert w2.shape == (C, 1)

    # ---- wrapper-side preprocessing (plain JAX, done once per call) -------------------
    # Fold the pivot mask into Wp:  (x*mask) @ Wp == x @ (diag(mask) @ Wp)
    mask = jnp.ones((F,), jnp.float32).at[pivots].set(0.0)
    wp_masked = wp.astype(jnp.float32) * mask[:, None]

    # Fuse [W1 | Wp_masked] into one (F, C_pad) weight, lane-padded to a multiple of 128.
    C_pad = max(128, ((C + 127) // 128) * 128)
    w_fused = jnp.zeros((F, C_pad), jnp.float32)
    w_fused = w_fused.at[:, :H].set(w1.astype(jnp.float32))
    w_fused = w_fused.at[:, H:C].set(wp_masked)

    b_fused = jnp.zeros((1, C_pad), jnp.float32)
    b_fused = b_fused.at[0, :H].set(b1.astype(jnp.float32))
    b_fused = b_fused.at[0, H:C].set(bp.astype(jnp.float32))

    # Lane selector: ReLU on [0, H) (and the zero padding), sigmoid on [H, H+P).
    relu_sel = jnp.ones((1, C_pad), jnp.float32).at[0, H:C].set(0.0)

    # Fused final weight row; padded lanes are 0 so they contribute nothing.
    w2_row = jnp.zeros((1, C_pad), jnp.float32).at[0, :C].set(w2.reshape(C).astype(jnp.float32))
    b2_2 = jnp.asarray(b2, jnp.float32).reshape(1, 1)

    # Batch tiling: rows padded to a multiple of 8, tile capped at `batch_tile`.
    TB = min(batch_tile, ((B + 7) // 8) * 8)
    B_pad = ((B + TB - 1) // TB) * TB
    x_p = jnp.zeros((B_pad, F), jnp.float32).at[:B].set(x2)

    grid = (B_pad // TB,)
    out = pl.pallas_call(
        fused_predictor_kernel,
        out_shape=jax.ShapeDtypeStruct((B_pad, 1), jnp.float32),
        grid=grid,
        in_specs=[
            pl.BlockSpec((TB, F), lambda i: (i, 0)),        # x tile
            pl.BlockSpec((F, C_pad), lambda i: (0, 0)),     # fused weight (resident)
            pl.BlockSpec((1, C_pad), lambda i: (0, 0)),     # fused bias   (resident)
            pl.BlockSpec((1, C_pad), lambda i: (0, 0)),     # activation selector (resident)
            pl.BlockSpec((1, C_pad), lambda i: (0, 0)),     # fused final weight row (resident)
            pl.BlockSpec((1, 1), lambda i: (0, 0)),         # final bias (resident)
        ],
        out_specs=pl.BlockSpec((TB, 1), lambda i: (i, 0)),
        compiler_params=pltpu.CompilerParams(dimension_semantics=("parallel",)),
    )(x_p, w_fused, b_fused, relu_sel, w2_row, b2_2)

    out = out[:B]
    return out.reshape(1) if single else out


def _reference(x, pivots, w1, b1, wp, bp, w2, b2):
    mask = jnp.ones((x.shape[-1],), jnp.float32).at[pivots].set(0.0)
    h = jnp.maximum(x @ w1 + b1, 0.0)
    p = jax.nn.sigmoid((x * mask) @ wp + bp)
    z = jnp.concatenate([h, p], axis=-1)
    return jax.nn.sigmoid(z @ w2 + b2)


if __name__ == "__main__":
    # Small, deterministic setup consistent with the module's __init__.
    F = 32            # input_features
    H = 32            # hidden_nodes (module default is 200; kept small)
    pivots = jnp.array([1, 5, 9, 13], dtype=jnp.int32)
    P = int(pivots.shape[0])
    B = 16            # batch of independent predictor evaluations

    key = jax.random.PRNGKey(0)
    k = jax.random.split(key, 7)
    x = jax.random.normal(k[0], (B, F), dtype=jnp.float32)

    # model: Linear(F, H) (stored as (in, out))
    w1 = jax.random.normal(k[1], (F, H), dtype=jnp.float32) * 0.1
    b1 = jax.random.normal(k[2], (H,), dtype=jnp.float32) * 0.1
    # TODO(synk): pivot_model is an arbitrary nn.Module in the spec; modeled here as Linear(F,P)+Sigmoid.
    wp = jax.random.normal(k[3], (F, P), dtype=jnp.float32) * 0.1
    bp = jax.random.normal(k[4], (P,), dtype=jnp.float32) * 0.1
    # classifier: Linear(H + P, 1)
    w2 = jax.random.normal(k[5], (H + P, 1), dtype=jnp.float32) * 0.1
    b2 = jax.random.normal(k[6], (1,), dtype=jnp.float32) * 0.1

    # Batched forward
    out = predictor_with_pivots(x, pivots, w1, b1, wp, bp, w2, b2)
    out = jax.block_until_ready(out)
    ref = _reference(x, pivots, w1, b1, wp, bp, w2, b2)
    assert out.shape == (B, 1)
    assert jnp.allclose(out, ref, atol=1e-5, rtol=1e-5), (out, ref)

    # Single-example forward (matches the module's 1-D forward semantics)
    out1 = jax.block_until_ready(predictor_with_pivots(x[0], pivots, w1, b1, wp, bp, w2, b2))
    assert out1.shape == (1,)
    assert jnp.allclose(out1, ref[0], atol=1e-5, rtol=1e-5), (out1, ref[0])

    print("KERNEL_OK")
</pallas_src>

<mosaic_0001>
module attributes {stable_mosaic.version = 11 : i64} {
  func.func @fused_predictor_kernel(%arg0: i32, %arg1: memref<16x32xf32, #tpu.memory_space<vmem>>, %arg2: memref<32x128xf32, #tpu.memory_space<vmem>>, %arg3: memref<1x128xf32, #tpu.memory_space<vmem>>, %arg4: memref<1x128xf32, #tpu.memory_space<vmem>>, %arg5: memref<1x128xf32, #tpu.memory_space<vmem>>, %arg6: memref<1x1xf32, #tpu.memory_space<vmem>>, %arg7: memref<16x1xf32, #tpu.memory_space<vmem>>) attributes {dimension_semantics = [#tpu.dimension_semantics<parallel>], iteration_bounds = array<i64: 1>, scalar_prefetch = 0 : i64, scratch_operands = 0 : i64, tpu.core_type = #tpu.core_type<tc>, window_params = [{transform_indices = @transform_0, window_bounds = array<i64: 16, 32>}, {pipeline_mode = #tpu.pipeline_mode<synchronous>, transform_indices = @transform_1, window_bounds = array<i64: 32, 128>}, {pipeline_mode = #tpu.pipeline_mode<synchronous>, transform_indices = @transform_2, window_bounds = array<i64: 1, 128>}, {pipeline_mode = #tpu.pipeline_mode<synchronous>, transform_indices = @transform_3, window_bounds = array<i64: 1, 128>}, {pipeline_mode = #tpu.pipeline_mode<synchronous>, transform_indices = @transform_4, window_bounds = array<i64: 1, 128>}, {pipeline_mode = #tpu.pipeline_mode<synchronous>, transform_indices = @transform_5, window_bounds = array<i64: 1, 1>}, {transform_indices = @transform_6, window_bounds = array<i64: 16, 1>}]} {
    %c0 = arith.constant 0 : index
    %c0_0 = arith.constant 0 : index
    %0 = vector.load %arg1[%c0, %c0_0] : memref<16x32xf32, #tpu.memory_space<vmem>>, vector<16x32xf32>
    %c0_1 = arith.constant 0 : index
    %c0_2 = arith.constant 0 : index
    %1 = vector.load %arg2[%c0_1, %c0_2] : memref<32x128xf32, #tpu.memory_space<vmem>>, vector<32x128xf32>
    %cst = arith.constant dense<0.000000e+00> : vector<16x128xf32>
    %2 = tpu.matmul %0, %1, %cst {dimension_numbers = #tpu.dot_dimension_numbers<[1], [0], [0], [1], [0, 0, 1, 1], [], []>} : vector<16x32xf32>, vector<32x128xf32>, vector<16x128xf32> -> vector<16x128xf32>
    %c0_3 = arith.constant 0 : index
    %c0_4 = arith.constant 0 : index
    %3 = vector.load %arg3[%c0_3, %c0_4] : memref<1x128xf32, #tpu.memory_space<vmem>>, vector<1x128xf32>
    %4 = vector.broadcast %3 : vector<1x128xf32> to vector<16x128xf32>
    %5 = arith.addf %2, %4 : vector<16x128xf32>
    %c0_5 = arith.constant 0 : index
    %c0_6 = arith.constant 0 : index
    %6 = vector.load %arg4[%c0_5, %c0_6] : memref<1x128xf32, #tpu.memory_space<vmem>>, vector<1x128xf32>
    %cst_7 = arith.constant 5.000000e-01 : f32
    %7 = vector.broadcast %cst_7 : f32 to vector<1x128xf32>
    %8 = arith.cmpf ogt, %6, %7 : vector<1x128xf32>
    %cst_8 = arith.constant 0.000000e+00 : f32
    %9 = vector.broadcast %cst_8 : f32 to vector<16x128xf32>
    %10 = arith.maximumf %5, %9 : vector<16x128xf32>
    %11 = arith.negf %5 : vector<16x128xf32>
    %12 = math.exp %11 : vector<16x128xf32>
    %cst_9 = arith.constant 1.000000e+00 : f32
    %13 = vector.broadcast %cst_9 : f32 to vector<16x128xf32>
    %14 = arith.addf %13, %12 : vector<16x128xf32>
    %15 = arith.divf %13, %14 : vector<16x128xf32>
    %16 = vector.shape_cast %8 : vector<1x128xi1> to vector<1x128xi1>
    %17 = vector.broadcast %16 : vector<1x128xi1> to vector<16x128xi1>
    %18 = arith.select %17, %10, %15 : vector<16x128xi1>, vector<16x128xf32>
    %c0_10 = arith.constant 0 : index
    %c0_11 = arith.constant 0 : index
    %19 = vector.load %arg5[%c0_10, %c0_11] : memref<1x128xf32, #tpu.memory_space<vmem>>, vector<1x128xf32>
    %20 = vector.broadcast %19 : vector<1x128xf32> to vector<16x128xf32>
    %21 = arith.mulf %18, %20 : vector<16x128xf32>
    %cst_12 = arith.constant dense<0.000000e+00> : vector<16xf32>
    %22 = vector.multi_reduction <add>, %21, %cst_12 [1] : vector<16x128xf32> to vector<16xf32>
    %23 = vector.shape_cast %22 : vector<16xf32> to vector<16x1xf32>
    %c0_13 = arith.constant 0 : index
    %c0_14 = arith.constant 0 : index
    %24 = vector.load %arg6[%c0_13, %c0_14] : memref<1x1xf32, #tpu.memory_space<vmem>>, vector<1x1xf32>
    %25 = vector.broadcast %24 : vector<1x1xf32> to vector<16x1xf32>
    %26 = arith.addf %23, %25 : vector<16x1xf32>
    %27 = arith.negf %26 : vector<16x1xf32>
    %28 = math.exp %27 : vector<16x1xf32>
    %cst_15 = arith.constant 1.000000e+00 : f32
    %29 = vector.broadcast %cst_15 : f32 to vector<16x1xf32>
    %30 = arith.addf %29, %28 : vector<16x1xf32>
    %31 = arith.divf %29, %30 : vector<16x1xf32>
    %c0_16 = arith.constant 0 : index
    %c0_17 = arith.constant 0 : index
    %32 = vector.load %arg7[%c0_16, %c0_17] : memref<16x1xf32, #tpu.memory_space<vmem>>, vector<16x1xf32>
    tpu.vector_store %arg7[%c0_16, %c0_17], %31 {strides = array<i32>} : memref<16x1xf32, #tpu.memory_space<vmem>>, vector<16x1xf32>,
    return
  }
  func.func @transform_0(%arg0: i32) -> (i32, i32) {
    %c0_i32 = arith.constant 0 : i32
    %c0_i32_0 = arith.constant 0 : i32
    return %arg0, %c0_i32 : i32, i32
  }
  func.func @transform_1(%arg0: i32) -> (i32, i32) {
    %c0_i32 = arith.constant 0 : i32
    %c0_i32_0 = arith.constant 0 : i32
    %c0_i32_1 = arith.constant 0 : i32
    return %c0_i32, %c0_i32_0 : i32, i32
  }
  func.func @transform_2(%arg0: i32) -> (i32, i32) {
    %c0_i32 = arith.constant 0 : i32
    %c0_i32_0 = arith.constant 0 : i32
    %c0_i32_1 = arith.constant 0 : i32
    return %c0_i32, %c0_i32_0 : i32, i32
  }
  func.func @transform_3(%arg0: i32) -> (i32, i32) {
    %c0_i32 = arith.constant 0 : i32
    %c0_i32_0 = arith.constant 0 : i32
    %c0_i32_1 = arith.constant 0 : i32
    return %c0_i32, %c0_i32_0 : i32, i32
  }
  func.func @transform_4(%arg0: i32) -> (i32, i32) {
    %c0_i32 = arith.constant 0 : i32
    %c0_i32_0 = arith.constant 0 : i32
    %c0_i32_1 = arith.constant 0 : i32
    return %c0_i32, %c0_i32_0 : i32, i32
  }
  func.func @transform_5(%arg0: i32) -> (i32, i32) {
    %c0_i32 = arith.constant 0 : i32
    %c0_i32_0 = arith.constant 0 : i32
    %c0_i32_1 = arith.constant 0 : i32
    return %c0_i32, %c0_i32_0 : i32, i32
  }
  func.func @transform_6(%arg0: i32) -> (i32, i32) {
    %c0_i32 = arith.constant 0 : i32
    %c0_i32_0 = arith.constant 0 : i32
    return %arg0, %c0_i32 : i32, i32
  }
}

</mosaic_0001>

<llo_original>
// kernel: tpu_custom_call.1
$region0: #{tpu_custom_call.1}
  #allocation0 [shape = 'u32[]', space=smem, size = 0x4, offset = 0x4, fixed_abs, tag = 'smem constant byte address 0x4 - core index']
  #allocation1 [shape = 'u32[144,128]{1,0:T(1,128)}', space=vmem, size = 0x12000, scoped, tag = 'internal scratch']
  #allocation2 [shape = 'f32[1,1]{1,0:T(1,128)S(1)}', space=vmem, size = 0x200, scoped, tag = 'scoped memory for tpu_custom_call.1']
  %s0 = inlined_call_operand.hbm [shape: f32[16,32], index: 0, kind: input, shape index: {}]
  %s1 = inlined_call_operand.hbm [shape: f32[32,128], index: 1, kind: input, shape index: {}]
  %s2 = inlined_call_operand.vmem [shape: f32[1,128], index: 2, kind: input, shape index: {}]
  %s3 = inlined_call_operand.vmem [shape: f32[1,128], index: 3, kind: input, shape index: {}]
  %s4 = inlined_call_operand.vmem [shape: f32[1,128], index: 4, kind: input, shape index: {}]
  %s5 = inlined_call_operand.<no memory space> [shape: f32[1,1], index: 5, kind: input, shape index: {}]
  %s6 = inlined_call_operand.vmem [shape: f32[16,1], index: 6, kind: output, shape index: {}]
  %s7 = sld [smem:[#allocation0]]
  $region42: #{tpu_custom_call.1} parent=0
    _
  %s9 = ssub.s32 1, %s7
  %s10 = scalar_select 0, %s9, %s7
  %v11 = vstv %s5
  %12 = vst [vmem:[#allocation2] sm:$0x1] %v11
  $region1: #{tpu_custom_call.1} parent=0
    #allocation3 [shape = 'u8[8192]{0}', space=vmem, size = 0x2000, scoped, tag = 'input window, operand 0, single buffered']
    #allocation4 [shape = 's32[1]{0}', space=sflag, size = 0x4, scoped, tag = 'scoped memory for tpu_custom_call.1']
    #allocation5 [shape = 'u8[16384]{0}', space=vmem, size = 0x4000, scoped, tag = 'input window, operand 1, single buffered']
    #allocation6 [shape = 's32[1]{0}', space=sflag, size = 0x4, scoped, tag = 'scoped memory for tpu_custom_call.1']
    %13 = vsyncpa [#allocation4], 0
    %14 = vsyncpa [#allocation6], 0
    // Predicated region
    $region2: #{tpu_custom_call.1} parent=1 // pred_check
      _
    $region3: #{tpu_custom_call.1} parent=1 // pred_check_branch
      %16 = sbr.rel (0) target = $region5
    $region4: #{tpu_custom_call.1} parent=1 // pred_region
      %s18 = ssub.s32 256, 256
      %19 = vsyncadd [#allocation4], %s18
      %s20 = sshll.u32 [#allocation3], 4
      %s21 = int_to_ptr.vmem [resolvable:$true] %s20
      %26 = dma.hbm_to_vmem [thread:$0]  %s0, 256, %s21, [#allocation4], 128, 128, 8
    $region5: #{tpu_custom_call.1} parent=1 // pred_fallthru
      _
    // Predicated region
    $region6: #{tpu_custom_call.1} parent=1 // pred_check
      _
    $region7: #{tpu_custom_call.1} parent=1 // pred_check_branch
      %28 = sbr.rel (0) target = $region9
    $region8: #{tpu_custom_call.1} parent=1 // pred_region
      %s30 = ssub.s32 512, 512
      %31 = vsyncadd [#allocation6], %s30
      %s32 = sshll.u32 [#allocation5], 4
      %s33 = int_to_ptr.vmem [resolvable:$true] %s32
      %38 = dma.hbm_to_vmem [thread:$0]  %s1, 512, %s33, [#allocation6], 128, 128, 8
    $region9: #{tpu_custom_call.1} parent=1 // pred_fallthru
      _
    // Predicated region
    $region10: #{tpu_custom_call.1} parent=1 // pred_check
      _
    $region11: #{tpu_custom_call.1} parent=1 // pred_check_branch
      %40 = sbr.rel (0) target = $region13
    $region12: #{tpu_custom_call.1} parent=1 // pred_region
      _
    $region13: #{tpu_custom_call.1} parent=1 // pred_fallthru
      _
    // Predicated region
    $region14: #{tpu_custom_call.1} parent=1 // pred_check
      _
    $region15: #{tpu_custom_call.1} parent=1 // pred_check_branch
      %42 = sbr.rel (0) target = $region17
    $region16: #{tpu_custom_call.1} parent=1 // pred_region
      _
    $region17: #{tpu_custom_call.1} parent=1 // pred_fallthru
      _
    // Predicated region
    $region18: #{tpu_custom_call.1} parent=1 // pred_check
      _
    $region19: #{tpu_custom_call.1} parent=1 // pred_check_branch
      %44 = sbr.rel (0) target = $region21
    $region20: #{tpu_custom_call.1} parent=1 // pred_region
      _
    $region21: #{tpu_custom_call.1} parent=1 // pred_fallthru
      _
    // Predicated region
    $region22: #{tpu_custom_call.1} parent=1 // pred_check
      _
    $region23: #{tpu_custom_call.1} parent=1 // pred_check_branch
      %46 = sbr.rel (0) target = $region25
    $region24: #{tpu_custom_call.1} parent=1 // pred_region
      _
    $region25: #{tpu_custom_call.1} parent=1 // pred_fallthru
      _
    // Predicated region
    $region26: #{tpu_custom_call.1} parent=1 // pred_check
      _
    $region27: #{tpu_custom_call.1} parent=1 // pred_check_branch
      %48 = sbr.rel (0) target = $region29
    $region28: #{tpu_custom_call.1} parent=1 // pred_region
      %49 = dma.done [#allocation4], 256
    $region29: #{tpu_custom_call.1} parent=1 // pred_fallthru
      _
    // Predicated region
    $region30: #{tpu_custom_call.1} parent=1 // pred_check
      _
    $region31: #{tpu_custom_call.1} parent=1 // pred_check_branch
      %51 = sbr.rel (0) target = $region33
    $region32: #{tpu_custom_call.1} parent=1 // pred_region
      %52 = dma.done [#allocation6], 512
    $region33: #{tpu_custom_call.1} parent=1 // pred_fallthru
      _
    %v53 = vld [vmem:[#allocation3] sm:$0xff]
    %v54 = vld [vmem:[#allocation3 + $0x8] sm:$0xff]
    %v55 = vld [vmem:[#allocation5] sm:$0xff]
    %v56 = vld [vmem:[#allocation5 + $0x8] sm:$0xff]
    %v57 = vld [vmem:[#allocation5 + $0x10] sm:$0xff]
    %v58 = vld [vmem:[#allocation5 + $0x18] sm:$0xff]
    %v59 = vld [vmem:[%s2] sm:$0x1]
    %v61 = vlaneseq
    %v62 = vshrl.u32 %v61, 7
    %v63 = vsub.s32 0, %v62
    %v64 = vrot.slane %v59, %v63
    %vm66 = vcmask 261120
    %v68 = vsel %vm66, %v53, 0
    %v71 = vsel %vm66, %v54, 0
    %73 = vmatprep.subr.mxu0 0.0
    %74 = vmatpush1.msra.mxu0 0.0
    %75 = vmatprep.subr.mxu0 0.0
    %76 = vmatpush1.msra.mxu0 0.0
    %77 = vmatprep.subr.mxu0 0.0
    %78 = vmatpush1.msra.mxu0 0.0
    %79 = vmatprep.subr.mxu0 0.0
    %80 = vmatpush1.msra.mxu0 0.0
    %81 = vmatprep.subr.mxu0 0.0
    %82 = vmatpush1.msra.mxu0 0.0
    %83 = vmatprep.subr.mxu0 0.0
    %84 = vmatpush1.msra.mxu0 0.0
    %85 = vmatprep.subr.mxu0 0.0
    %86 = vmatpush1.msra.mxu0 0.0
    %87 = vmatprep.subr.mxu0 0.0
    %88 = vmatpush1.msra.mxu0 0.0
    %89 = vmatprep.subr.mxu0 0.0
    %90 = vmatpush1.msra.mxu0 0.0
    %91 = vmatprep.subr.mxu0 0.0
    %92 = vmatpush1.msra.mxu0 0.0
    %93 = vmatprep.subr.mxu0 0.0
    %94 = vmatpush1.msra.mxu0 0.0
    %95 = vmatprep.subr.mxu0 0.0
    %96 = vmatpush1.msra.mxu0 0.0
    %97 = vmatprep.subr.mxu0 0.0
    %98 = vmatpush1.msra.mxu0 %v58
    %99 = vmatprep.subr.mxu0 0.0
    %100 = vmatpush1.msra.mxu0 %v57
    %101 = vmatprep.subr.mxu0 0.0
    %102 = vmatpush1.msra.mxu0 %v56
    %103 = vmatprep.subr.mxu0 0.0
    %104 = vmatpush1.msra.mxu0 %v55
    %105 = vmatprep.subr.mxu0 0.0
    %106 = vmatpush2.msra.mxu0 0.0
    %107 = vmatprep.subr.mxu0 0.0
    %108 = vmatpush2.msra.mxu0 0.0
    %109 = vmatprep.subr.mxu0 0.0
    %110 = vmatpush2.msra.mxu0 0.0
    %111 = vmatprep.subr.mxu0 0.0
    %112 = vmatpush2.msra.mxu0 0.0
    %113 = vmatprep.subr.mxu0 0.0
    %114 = vmatpush2.msra.mxu0 0.0
    %115 = vmatprep.subr.mxu0 0.0
    %116 = vmatpush2.msra.mxu0 0.0
    %117 = vmatprep.subr.mxu0 0.0
    %118 = vmatpush2.msra.mxu0 0.0
    %119 = vmatprep.subr.mxu0 0.0
    %120 = vmatpush2.msra.mxu0 0.0
    %121 = vmatprep.subr.mxu0 0.0
    %122 = vmatpush2.msra.mxu0 0.0
    %123 = vmatprep.subr.mxu0 0.0
    %124 = vmatpush2.msra.mxu0 0.0
    %125 = vmatprep.subr.mxu0 0.0
    %126 = vmatpush2.msra.mxu0 0.0
    %127 = vmatprep.subr.mxu0 0.0
    %128 = vmatpush2.msra.mxu0 0.0
    %129 = vmatprep.subr.mxu0 0.0
    %130 = vmatpush2.msra.mxu0 0.0
    %131 = vmatprep.subr.mxu0 0.0
    %132 = vmatpush2.msra.mxu0 0.0
    %133 = vmatprep.subr.mxu0 0.0
    %134 = vmatpush2.msra.mxu0 0.0
    %135 = vmatprep.subr.mxu0 0.0
    %136 = vmatpush2.msra.mxu0 0.0
    %137 = vmatprep.mubr.f32.mxu0 0.0
    %138 = vmatmul.mubr.f32.gmra.mxu0 %v68
    %v139 = vpop.f32.mrf.mxu0
    %v140 = vadd.f32 %v64, %v139
    %v141 = vpop.f32.mrf.mxu0
    %142 = vmatprep.mubr.f32.mxu0 0.0
    %143 = vmatmul.mubr.f32.gmra.mxu0 %v71
    %v144 = vpop.f32.mrf.mxu0
    %v145 = vadd.f32 %v64, %v144
    %v146 = vpop.f32.mrf.mxu0
    %147 = vdwg.mxu0
    %v148 = vld [vmem:[%s3] sm:$0x1]
    %vm149 = vcmp.gt.f32.partialorder %v148, 0.5
    %v150 = vmax.f32 %v140, 0.0
    %v151 = vmax.f32 %v145, 0.0
    %v152 = vxor.u32 %v140, 2147483648
    %v153 = vxor.u32 %v145, 2147483648
    %v154 = vmul.f32 %v152, 1.442695
    %v155 = vpow.pop %v154
    %v156 = vmul.f32 %v153, 1.442695
    %v157 = vpow.pop %v156
    %v158 = vadd.f32 %v155, 1.0
    %v159 = vadd.f32 %v157, 1.0
    %v160 = vrcp.pop %v158
    %v161 = vmul.f32 1.0, %v160
    %v162 = vrcp.pop %v159
    %v163 = vmul.f32 1.0, %v162
    %v164 = vsel %vm149, 1, 0
    %v165 = vlaneseq
    %v166 = vshrl.u32 %v165, 7
    %v167 = vsub.s32 0, %v166
    %v168 = vrot.slane %v164, %v167
    %vm169 = vcmp.eq.s32.totalorder %v168, 1
    %v170 = vsel %vm169, %v150, %v161
    %v171 = vsel %vm169, %v151, %v163
    %v172 = vld [vmem:[%s4] sm:$0x1]
    %v174 = vlaneseq
    %v175 = vshrl.u32 %v174, 7
    %v176 = vsub.s32 0, %v175
    %v177 = vrot.slane %v172, %v176
    %v179 = vmul.f32 %v170, %v177
    %v180 = vmul.f32 %v171, %v177
    %181 = vadd.xlane.f32.xlu0 %v179
    %v182 = vpop.xlane.xlu0 %181
    %183 = vadd.xlane.f32.xlu0 %v180
    %v184 = vpop.xlane.xlu0 %183
    %v185 = vld [vmem:[#allocation2] sm:$0x1]
    %v187 = vlaneseq
    %v188 = vshrl.u32 %v187, 7
    %v189 = vsub.s32 0, %v188
    %v190 = vrot.slane %v185, %v189
    %v192 = vadd.f32 %v182, %v190
    %v193 = vadd.f32 %v184, %v190
    %v194 = vxor.u32 %v192, 2147483648
    %v195 = vxor.u32 %v193, 2147483648
    %v196 = vmul.f32 %v194, 1.442695
    %v197 = vpow.pop %v196
    %v198 = vmul.f32 %v195, 1.442695
    %v199 = vpow.pop %v198
    %v200 = vadd.f32 %v197, 1.0
    %v201 = vadd.f32 %v199, 1.0
    %v202 = vrcp.pop %v200
    %v203 = vmul.f32 1.0, %v202
    %v204 = vrcp.pop %v201
    %v205 = vmul.f32 1.0, %v204
    %vm206 = vcmask 7168
    %207 = vst.msk [vmem:[%s6] sm:$0xff] %vm206, %v203
    %208 = vst.msk [vmem:[%s6 + $0x8] sm:$0xff] %vm206, %v205
    // Predicated region
    $region34: #{tpu_custom_call.1} parent=1 // pred_check
      _
    $region35: #{tpu_custom_call.1} parent=1 // pred_check_branch
      %210 = sbr.rel (0) target = $region37
    $region36: #{tpu_custom_call.1} parent=1 // pred_region
      _
    $region37: #{tpu_custom_call.1} parent=1 // pred_fallthru
      _
    // Predicated region
    $region38: #{tpu_custom_call.1} parent=1 // pred_check
      _
    $region39: #{tpu_custom_call.1} parent=1 // pred_check_branch
      %212 = sbr.rel (0) target = $region41
    $region40: #{tpu_custom_call.1} parent=1 // pred_region
      _
    $region41: #{tpu_custom_call.1} parent=1 // pred_fallthru
      _
    %213 = vsyncpa [#allocation4], 1
    %214 = vsyncpa [#allocation6], 1

</llo_original>
